<compile_context>
chip_gen: v7x
topology: tpu7x:2x2x1
jax: 0.10.0
libtpu: 0.0.40
codegen_flags: <defaults>
</compile_context>

<pallas_src>
import jax
import jax.numpy as jnp
from jax.experimental import pallas as pl
from jax.experimental.pallas import tpu as pltpu


def _round_up(x, m):
    return ((x + m - 1) // m) * m


def _largest_divisor(dim, candidates):
    for c in candidates:
        if dim % c == 0:
            return c
    return dim  # candidates end in 128 and dim is a multiple of 128 -> never reached


# ----------------------------------------------------------------------------
# Kernels
# ----------------------------------------------------------------------------
def _linear_kernel(x_ref, wt_ref, b_ref, o_ref):
    # Single K step: pure-MXU body + bias epilogue (BN folded in wrapper).
    # x_ref : (tm, tk)  bf16   wt_ref : (tk, tn) bf16
    # b_ref : (1, tn)   f32    o_ref  : (tm, tn)
    o_ref[...] = (
        jnp.dot(x_ref[...], wt_ref[...], preferred_element_type=jnp.float32)
        + b_ref[...]
    ).astype(o_ref.dtype)


def _linear_acc_kernel(x_ref, wt_ref, b_ref, o_ref, acc_ref):
    # Multi K step: f32 VMEM accumulator resident across the (last) K axis.
    k = pl.program_id(2)

    @pl.when(k == 0)
    def _():
        acc_ref[...] = jnp.zeros_like(acc_ref)

    acc_ref[...] += jnp.dot(x_ref[...], wt_ref[...],
                            preferred_element_type=jnp.float32)

    @pl.when(k == pl.num_programs(2) - 1)
    def _():
        o_ref[...] = (acc_ref[...] + b_ref[...]).astype(o_ref.dtype)


def _identity_kernel(bn_ref, x_ref, o_ref):
    # fc_out_h is None -> Linear is Identity: just the BN affine on the flat view.
    o_ref[...] = (x_ref[...] * bn_ref[0] + bn_ref[1]).astype(o_ref.dtype)


# ----------------------------------------------------------------------------
# Wrapper
# ----------------------------------------------------------------------------
def skipcnn_forward(x, bn_gamma, bn_beta, bn_mean, bn_var,
                    weight=None, bias=None, *, eps=1e-5):
    """SkipCNN.forward (eval-mode BN).

    x      : (N, 1, cnn_seg_length, ms_n_mels) float32
    weight : (fc_out_h, fan_in) or None   (None -> nn.Identity path)
    bias   : (fc_out_h,)        or None
    Returns (N, fc_out_h) (or (N, fan_in) for the identity path).
    """
    N = x.shape[0]
    fan_in = x.shape[1] * x.shape[2] * x.shape[3]
    x_flat = x.reshape(N, fan_in)                       # == x.view(-1, fan_in)

    # BatchNorm2d(1) in inference mode folds to a single scalar scale/shift.
    scale = (bn_gamma / jnp.sqrt(bn_var + eps)).astype(jnp.float32)
    shift = (bn_beta - bn_mean * scale).astype(jnp.float32)

    # ---------------------------------------------------------------- identity
    if weight is None:
        bn_params = jnp.stack([scale, shift]).astype(jnp.float32)  # runtime data
        if N >= 64:
            tm = min(1024, _round_up(pl.cdiv(N, 2), 8))   # >=2 parallel steps (v7x)
        else:
            tm = _round_up(N, 8)
        n_pad = _round_up(N, tm)
        x_p = jnp.pad(x_flat, ((0, n_pad - N), (0, 0)))

        out = pl.pallas_call(
            _identity_kernel,
            out_shape=jax.ShapeDtypeStruct((n_pad, fan_in), x.dtype),
            grid_spec=pltpu.PrefetchScalarGridSpec(
                num_scalar_prefetch=0,
                grid=(n_pad // tm,),
                in_specs=[
                    pl.BlockSpec(memory_space=pltpu.MemorySpace.SMEM),  # [scale, shift]
                    pl.BlockSpec((tm, fan_in), lambda i: (i, 0)),
                ],
                out_specs=pl.BlockSpec((tm, fan_in), lambda i: (i, 0)),
            ),
            compiler_params=pltpu.CompilerParams(
                dimension_semantics=("parallel",)),
        )(bn_params, x_p)
        return out[:N]

    # ------------------------------------------------------------------ linear
    fc_out = weight.shape[0]

    # Fold BN into the matmul (pure-MXU kernel body):
    #   (x*s + t) @ W^T + b  ==  x @ (s*W)^T + (b + t * W.sum(axis=1))
    w_eff = weight * scale                                # (fc_out, fan_in)
    b_eff = bias + shift * jnp.sum(weight, axis=1)        # (fc_out,)

    # Lane-dense output + always-divisible K: pad fc_out and fan_in to 128 multiples.
    k_pad = _round_up(fan_in, 128)
    out_pad = _round_up(fc_out, 128)

    wt = jnp.pad(w_eff.T, ((0, k_pad - fan_in), (0, out_pad - fc_out))
                 ).astype(jnp.bfloat16)                   # (k_pad, out_pad)
    b2d = jnp.pad(b_eff, (0, out_pad - fc_out)).reshape(1, out_pad
                  ).astype(jnp.float32)

    # M tile: multiple of 16 (bf16 sublane packing), >=2 parallel steps for large N.
    if N >= 64:
        tm = min(512, _round_up(pl.cdiv(N, 2), 16))
    else:
        tm = _round_up(N, 16)
    n_pad = _round_up(N, tm)
    x_p = jnp.pad(x_flat, ((0, n_pad - N), (0, k_pad - fan_in))
                  ).astype(jnp.bfloat16)                  # (n_pad, k_pad) bf16

    # K / N tiles: full dim when small (single step), else 256-aligned where possible.
    tk = k_pad if k_pad <= 1024 else _largest_divisor(k_pad, (1024, 512, 256, 128))
    tn = out_pad if out_pad <= 512 else _largest_divisor(out_pad, (512, 256, 128))

    m_steps = n_pad // tm
    n_steps = out_pad // tn
    k_steps = k_pad // tk

    cost = pl.CostEstimate(
        flops=2 * n_pad * k_pad * out_pad,
        transcendentals=0,
        bytes_accessed=(x_p.size * 2 * n_steps          # x re-streamed per j tile
                        + wt.size * 2 * m_steps         # W re-streamed per i tile
                        + b2d.size * 4 * m_steps
                        + n_pad * out_pad * 4),
    )

    if k_steps == 1:
        out = pl.pallas_call(
            _linear_kernel,
            out_shape=jax.ShapeDtypeStruct((n_pad, out_pad), x.dtype),
            grid_spec=pltpu.PrefetchScalarGridSpec(
                num_scalar_prefetch=0,
                grid=(m_steps, n_steps),
                in_specs=[
                    pl.BlockSpec((tm, tk), lambda i, j: (i, 0)),   # x tile
                    pl.BlockSpec((tk, tn), lambda i, j: (0, j)),   # W^T tile
                    pl.BlockSpec((1, tn), lambda i, j: (0, j)),    # augmented bias
                ],
                out_specs=pl.BlockSpec((tm, tn), lambda i, j: (i, j)),
            ),
            compiler_params=pltpu.CompilerParams(
                dimension_semantics=("parallel", "parallel")),
            cost_estimate=cost,
        )(x_p, wt, b2d)
    else:
        out = pl.pallas_call(
            _linear_acc_kernel,
            out_shape=jax.ShapeDtypeStruct((n_pad, out_pad), x.dtype),
            grid_spec=pltpu.PrefetchScalarGridSpec(
                num_scalar_prefetch=0,
                grid=(m_steps, n_steps, k_steps),                  # reduction axis last
                in_specs=[
                    pl.BlockSpec((tm, tk), lambda i, j, k: (i, k)),
                    pl.BlockSpec((tk, tn), lambda i, j, k: (k, j)),
                    pl.BlockSpec((1, tn), lambda i, j, k: (0, j)),
                ],
                out_specs=pl.BlockSpec((tm, tn), lambda i, j, k: (i, j)),
                scratch_shapes=[pltpu.VMEM((tm, tn), jnp.float32)],
            ),
            compiler_params=pltpu.CompilerParams(
                dimension_semantics=("parallel", "parallel", "arbitrary")),
            cost_estimate=cost,
        )(x_p, wt, b2d)

    return out[:N, :fc_out]


# ----------------------------------------------------------------------------
# Demo
# ----------------------------------------------------------------------------
if __name__ == "__main__":
    cnn_seg_length = 8
    ms_n_mels = 16
    fc_out_h = 32
    batch = 4
    fan_in = cnn_seg_length * ms_n_mels                    # 128

    key = jax.random.PRNGKey(0)
    kx, kw, kb = jax.random.split(key, 3)
    x = jax.random.normal(kx, (batch, 1, cnn_seg_length, ms_n_mels), dtype=jnp.float32)
    weight = jax.random.normal(kw, (fc_out_h, fan_in), dtype=jnp.float32) * 0.05
    bias = jax.random.normal(kb, (fc_out_h,), dtype=jnp.float32) * 0.05

    # BatchNorm2d(1) parameters / running buffers (eval mode).
    gamma = jnp.float32(1.05)
    beta = jnp.float32(0.1)
    running_mean = jnp.float32(0.02)
    running_var = jnp.float32(0.9)
    eps = 1e-5

    out = skipcnn_forward(x, gamma, beta, running_mean, running_var,
                          weight, bias, eps=eps)
    out = jax.block_until_ready(out)

    # Pure-JAX reference.
    scale = gamma / jnp.sqrt(running_var + eps)
    shift = beta - running_mean * scale
    x_flat_ref = (x * scale + shift).reshape(batch, fan_in)
    ref = x_flat_ref @ weight.T + bias

    assert out.shape == (batch, fc_out_h)
    assert jnp.allclose(out, ref, atol=2e-2, rtol=2e-2), "linear path mismatch vs. reference"

    # Identity path (fc_out_h=None -> nn.Identity).
    out_id = jax.block_until_ready(
        skipcnn_forward(x, gamma, beta, running_mean, running_var, None, None, eps=eps)
    )
    assert out_id.shape == (batch, fan_in)
    assert jnp.allclose(out_id, x_flat_ref, atol=1e-5), "identity path mismatch vs. reference"

    print("KERNEL_OK")
</pallas_src>

<mosaic_0001>
module attributes {stable_mosaic.version = 11 : i64} {
  func.func @_linear_kernel(%arg0: i32, %arg1: i32, %arg2: memref<16x128xbf16, #tpu.memory_space<vmem>>, %arg3: memref<128x128xbf16, #tpu.memory_space<vmem>>, %arg4: memref<1x128xf32, #tpu.memory_space<vmem>>, %arg5: memref<16x128xf32, #tpu.memory_space<vmem>>) attributes {dimension_semantics = [#tpu.dimension_semantics<parallel>, #tpu.dimension_semantics<parallel>], iteration_bounds = array<i64: 1, 1>, scalar_prefetch = 0 : i64, scratch_operands = 0 : i64, tpu.core_type = #tpu.core_type<tc>, window_params = [{transform_indices = @transform_0, window_bounds = array<i64: 16, 128>}, {transform_indices = @transform_1, window_bounds = array<i64: 128, 128>}, {transform_indices = @transform_2, window_bounds = array<i64: 1, 128>}, {transform_indices = @transform_3, window_bounds = array<i64: 16, 128>}]} {
    %c0 = arith.constant 0 : index
    %c0_0 = arith.constant 0 : index
    %0 = vector.load %arg2[%c0, %c0_0] : memref<16x128xbf16, #tpu.memory_space<vmem>>, vector<16x128xbf16>
    %c0_1 = arith.constant 0 : index
    %c0_2 = arith.constant 0 : index
    %1 = vector.load %arg3[%c0_1, %c0_2] : memref<128x128xbf16, #tpu.memory_space<vmem>>, vector<128x128xbf16>
    %cst = arith.constant dense<0.000000e+00> : vector<16x128xf32>
    %2 = tpu.matmul %0, %1, %cst {dimension_numbers = #tpu.dot_dimension_numbers<[1], [0], [0], [1], [0, 0, 1, 1], [], []>} : vector<16x128xbf16>, vector<128x128xbf16>, vector<16x128xf32> -> vector<16x128xf32>
    %c0_3 = arith.constant 0 : index
    %c0_4 = arith.constant 0 : index
    %3 = vector.load %arg4[%c0_3, %c0_4] : memref<1x128xf32, #tpu.memory_space<vmem>>, vector<1x128xf32>
    %4 = vector.broadcast %3 : vector<1x128xf32> to vector<16x128xf32>
    %5 = arith.addf %2, %4 : vector<16x128xf32>
    %c0_5 = arith.constant 0 : index
    %c0_6 = arith.constant 0 : index
    %6 = vector.load %arg5[%c0_5, %c0_6] : memref<16x128xf32, #tpu.memory_space<vmem>>, vector<16x128xf32>
    tpu.vector_store %arg5[%c0_5, %c0_6], %5 {strides = array<i32>} : memref<16x128xf32, #tpu.memory_space<vmem>>, vector<16x128xf32>,
    return
  }
  func.func @transform_0(%arg0: i32, %arg1: i32) -> (i32, i32) {
    %c0_i32 = arith.constant 0 : i32
    %c0_i32_0 = arith.constant 0 : i32
    return %arg0, %c0_i32 : i32, i32
  }
  func.func @transform_1(%arg0: i32, %arg1: i32) -> (i32, i32) {
    %c0_i32 = arith.constant 0 : i32
    %c0_i32_0 = arith.constant 0 : i32
    return %c0_i32, %arg1 : i32, i32
  }
  func.func @transform_2(%arg0: i32, %arg1: i32) -> (i32, i32) {
    %c0_i32 = arith.constant 0 : i32
    %c0_i32_0 = arith.constant 0 : i32
    return %c0_i32, %arg1 : i32, i32
  }
  func.func @transform_3(%arg0: i32, %arg1: i32) -> (i32, i32) {
    %c0_i32 = arith.constant 0 : i32
    return %arg0, %arg1 : i32, i32
  }
}

</mosaic_0001>

<llo_original>
// kernel: tpu_custom_call.1
$region0: #{tpu_custom_call.1}
  #allocation0 [shape = 'u32[]', space=smem, size = 0x4, offset = 0x4, fixed_abs, tag = 'smem constant byte address 0x4 - core index']
  #allocation1 [shape = 'u32[144,128]{1,0:T(1,128)}', space=vmem, size = 0x12000, scoped, tag = 'internal scratch']
  %s0 = inlined_call_operand.hbm [shape: bf16[16,128], index: 0, kind: input, shape index: {}]
  %s1 = inlined_call_operand.hbm [shape: bf16[128,128], index: 1, kind: input, shape index: {}]
  %s2 = inlined_call_operand.vmem [shape: f32[1,128], index: 2, kind: input, shape index: {}]
  %s3 = inlined_call_operand.hbm [shape: f32[16,128], index: 3, kind: output, shape index: {}]
  %s4 = sld [smem:[#allocation0]]
  $region30: #{tpu_custom_call.1} parent=0
    _
  %s6 = ssub.s32 1, %s4
  %s7 = scalar_select 0, %s6, %s4
  $region1: #{tpu_custom_call.1} parent=0
    #allocation2 [shape = 'u8[4096]{0}', space=vmem, size = 0x1000, scoped, tag = 'input window, operand 0, single buffered']
    #allocation3 [shape = 's32[1]{0}', space=sflag, size = 0x4, scoped, tag = 'scoped memory for tpu_custom_call.1']
    #allocation4 [shape = 's32[1]{0}', space=sflag, size = 0x4, scoped, tag = 'scoped memory for tpu_custom_call.1']
    #allocation5 [shape = 'u8[32768]{0}', space=vmem, size = 0x8000, scoped, tag = 'input window, operand 1, single buffered']
    #allocation6 [shape = 's32[1]{0}', space=sflag, size = 0x4, scoped, tag = 'scoped memory for tpu_custom_call.1']
    #allocation7 [shape = 'u8[8192]{0}', space=vmem, size = 0x2000, scoped, tag = 'output window, operand 0, single buffered']
    %8 = vsyncpa [#allocation3], 0
    %9 = vsyncpa [#allocation6], 0
    %10 = vsyncpa [#allocation4], 0
    // Predicated region
    $region2: #{tpu_custom_call.1} parent=1 // pred_check
      _
    $region3: #{tpu_custom_call.1} parent=1 // pred_check_branch
      %12 = sbr.rel (0) target = $region5
    $region4: #{tpu_custom_call.1} parent=1 // pred_region
      %s14 = ssub.s32 128, 128
      %15 = vsyncadd [#allocation3], %s14
      %s16 = sshll.u32 [#allocation2], 4
      %s17 = int_to_ptr.vmem [resolvable:$true] %s16
      %22 = dma.hbm_to_vmem [thread:$0]  %s0, 128, %s17, [#allocation3], 64, 64, 4
    $region5: #{tpu_custom_call.1} parent=1 // pred_fallthru
      _
    // Predicated region
    $region6: #{tpu_custom_call.1} parent=1 // pred_check
      _
    $region7: #{tpu_custom_call.1} parent=1 // pred_check_branch
      %24 = sbr.rel (0) target = $region9
    $region8: #{tpu_custom_call.1} parent=1 // pred_region
      %s26 = ssub.s32 1024, 1024
      %27 = vsyncadd [#allocation6], %s26
      %s28 = sshll.u32 [#allocation5], 4
      %s29 = int_to_ptr.vmem [resolvable:$true] %s28
      %34 = dma.hbm_to_vmem [thread:$0]  %s1, 1024, %s29, [#allocation6], 64, 64, 4
    $region9: #{tpu_custom_call.1} parent=1 // pred_fallthru
      _
    // Predicated region
    $region10: #{tpu_custom_call.1} parent=1 // pred_check
      _
    $region11: #{tpu_custom_call.1} parent=1 // pred_check_branch
      %36 = sbr.rel (0) target = $region13
    $region12: #{tpu_custom_call.1} parent=1 // pred_region
      _
    $region13: #{tpu_custom_call.1} parent=1 // pred_fallthru
      _
    // Predicated region
    $region14: #{tpu_custom_call.1} parent=1 // pred_check
      _
    $region15: #{tpu_custom_call.1} parent=1 // pred_check_branch
      %38 = sbr.rel (0) target = $region17
    $region16: #{tpu_custom_call.1} parent=1 // pred_region
      %39 = dma.done [#allocation3], 128
    $region17: #{tpu_custom_call.1} parent=1 // pred_fallthru
      _
    // Predicated region
    $region18: #{tpu_custom_call.1} parent=1 // pred_check
      _
    $region19: #{tpu_custom_call.1} parent=1 // pred_check_branch
      %41 = sbr.rel (0) target = $region21
    $region20: #{tpu_custom_call.1} parent=1 // pred_region
      %42 = dma.done [#allocation6], 1024
    $region21: #{tpu_custom_call.1} parent=1 // pred_fallthru
      _
    %v44 = vld [vmem:[#allocation2] sm:$0xf]
    %v45 = vld [vmem:[#allocation2 + $0x4] sm:$0xf]
    %v46 = vld [vmem:[#allocation5] sm:$0xf]
    %v47 = vld [vmem:[#allocation5 + $0x4] sm:$0xf]
    %v48 = vld [vmem:[#allocation5 + $0x8] sm:$0xf]
    %v49 = vld [vmem:[#allocation5 + $0xc] sm:$0xf]
    %v50 = vld [vmem:[#allocation5 + $0x10] sm:$0xf]
    %v51 = vld [vmem:[#allocation5 + $0x14] sm:$0xf]
    %v52 = vld [vmem:[#allocation5 + $0x18] sm:$0xf]
    %v53 = vld [vmem:[#allocation5 + $0x1c] sm:$0xf]
    %v54 = vld [vmem:[#allocation5 + $0x20] sm:$0xf]
    %v55 = vld [vmem:[#allocation5 + $0x24] sm:$0xf]
    %v56 = vld [vmem:[#allocation5 + $0x28] sm:$0xf]
    %v57 = vld [vmem:[#allocation5 + $0x2c] sm:$0xf]
    %v58 = vld [vmem:[#allocation5 + $0x30] sm:$0xf]
    %v59 = vld [vmem:[#allocation5 + $0x34] sm:$0xf]
    %v60 = vld [vmem:[#allocation5 + $0x38] sm:$0xf]
    %v61 = vld [vmem:[#allocation5 + $0x3c] sm:$0xf]
    %v62 = vld [vmem:[%s2] sm:$0x1]
    %v64 = vlaneseq
    %v65 = vshrl.u32 %v64, 7
    %v66 = vsub.s32 0, %v65
    %v67 = vrot.slane %v62, %v66
    %v71 = vunpack.c.l.b16 %v44
    %v72 = vunpack.c.l.b16 %v45
    %v73 = vpack.c.b16 %v72, %v71
    %v91 = vunpack.c.l.b16 %v46
    %v92 = vunpack.c.l.b16 %v47
    %v93 = vunpack.c.l.b16 %v48
    %v94 = vunpack.c.l.b16 %v49
    %v95 = vunpack.c.l.b16 %v50
    %v96 = vunpack.c.l.b16 %v51
    %v97 = vunpack.c.l.b16 %v52
    %v98 = vunpack.c.l.b16 %v53
    %v99 = vunpack.c.l.b16 %v54
    %v100 = vunpack.c.l.b16 %v55
    %v101 = vunpack.c.l.b16 %v56
    %v102 = vunpack.c.l.b16 %v57
    %v103 = vunpack.c.l.b16 %v58
    %v104 = vunpack.c.l.b16 %v59
    %v105 = vunpack.c.l.b16 %v60
    %v106 = vunpack.c.l.b16 %v61
    %v107 = vpack.c.b16 %v92, %v91
    %v108 = vpack.c.b16 %v94, %v93
    %v109 = vpack.c.b16 %v96, %v95
    %v110 = vpack.c.b16 %v98, %v97
    %v111 = vpack.c.b16 %v100, %v99
    %v112 = vpack.c.b16 %v102, %v101
    %v113 = vpack.c.b16 %v104, %v103
    %v114 = vpack.c.b16 %v106, %v105
    %123 = vmatprep.subr.bf16.mxu0 0
    %124 = vmatpush1.bf16.msra.mxu0 %v107
    %125 = vmatprep.subr.bf16.mxu0 0
    %126 = vmatpush1.bf16.msra.mxu0 %v108
    %127 = vmatprep.subr.bf16.mxu0 0
    %128 = vmatpush1.bf16.msra.mxu0 %v109
    %129 = vmatprep.subr.bf16.mxu0 0
    %130 = vmatpush1.bf16.msra.mxu0 %v110
    %131 = vmatprep.subr.bf16.mxu0 0
    %132 = vmatpush1.bf16.msra.mxu0 %v111
    %133 = vmatprep.subr.bf16.mxu0 0
    %134 = vmatpush1.bf16.msra.mxu0 %v112
    %135 = vmatprep.subr.bf16.mxu0 0
    %136 = vmatpush1.bf16.msra.mxu0 %v113
    %137 = vmatprep.subr.bf16.mxu0 0
    %138 = vmatpush1.bf16.msra.mxu0 %v114
    %139 = vmatprep.subr.bf16.mxu0 0
    %140 = vmatpush1.bf16.msra.mxu0 0
    %141 = vmatprep.subr.bf16.mxu0 0
    %142 = vmatpush1.bf16.msra.mxu0 0
    %143 = vmatprep.subr.bf16.mxu0 0
    %144 = vmatpush1.bf16.msra.mxu0 0
    %145 = vmatprep.subr.bf16.mxu0 0
    %146 = vmatpush1.bf16.msra.mxu0 0
    %147 = vmatprep.subr.bf16.mxu0 0
    %148 = vmatpush1.bf16.msra.mxu0 0
    %149 = vmatprep.subr.bf16.mxu0 0
    %150 = vmatpush1.bf16.msra.mxu0 0
    %151 = vmatprep.subr.bf16.mxu0 0
    %152 = vmatpush1.bf16.msra.mxu0 0
    %153 = vmatprep.subr.bf16.mxu0 0
    %154 = vmatpush1.bf16.msra.mxu0 0
    %155 = vmatprep.mubr.bf16.mxu0 0
    %156 = vmatmul.mubr.bf16.gmra.mrb[0].mxu0 %v73
    %v157 = vpop.f32.mrb[0].mxu0
    %v158 = vadd.f32 %v67, %v157
    %v159 = vpop.f32.mrb[0].mxu0
    %v160 = vpop.f32.mrb[0].mxu0
    %v161 = vadd.f32 %v67, %v160
    %v162 = vpop.f32.mrb[0].mxu0
    %163 = vdwg.mxu0
    %164 = vst [vmem:[#allocation7] sm:$0xff] %v158
    %165 = vst [vmem:[#allocation7 + $0x8] sm:$0xff] %v161
    // Predicated region
    $region22: #{tpu_custom_call.1} parent=1 // pred_check
      _
    $region23: #{tpu_custom_call.1} parent=1 // pred_check_branch
      %167 = sbr.rel (0) target = $region25
    $region24: #{tpu_custom_call.1} parent=1 // pred_region
      %s169 = ssub.s32 256, 256
      %170 = vsyncadd [#allocation4], %s169
      %s171 = sshll.u32 [#allocation7], 4
      %s172 = int_to_ptr.vmem [resolvable:$true] %s171
      %177 = dma.vmem_to_hbm [thread:$0]  %s172, 256, %s3, [#allocation4], 128, 128, 8
    $region25: #{tpu_custom_call.1} parent=1 // pred_fallthru
      _
    // Predicated region
    $region26: #{tpu_custom_call.1} parent=1 // pred_check
      _
    $region27: #{tpu_custom_call.1} parent=1 // pred_check_branch
      %179 = sbr.rel (0) target = $region29
    $region28: #{tpu_custom_call.1} parent=1 // pred_region
      %180 = dma.done [#allocation4], 256
    $region29: #{tpu_custom_call.1} parent=1 // pred_fallthru
      _
    %181 = vsyncpa [#allocation3], 1
    %182 = vsyncpa [#allocation6], 1
    %183 = vsyncpa [#allocation4], 1

</llo_original>
